<compile_context>
chip_gen: v7x
topology: tpu7x:2x2x1
jax: 0.10.0
libtpu: 0.0.40
codegen_flags: <defaults>
</compile_context>

<pallas_src>
import functools
import math

import jax
import jax.numpy as jnp
from jax.experimental import pallas as pl
from jax.experimental.pallas import tpu as pltpu


def _eca_kernel_size(channels, gamma=2, beta=1):
    """Adaptive kernel size used by timm's CecaModule."""
    t = int(abs(math.log(channels, 2) + beta) / gamma)
    return max(t if t % 2 else t + 1, 3)


def _circular_conv_sigmoid(pooled, w_ref, dbl_ref, *, k, pad):
    """sigmoid(circular_conv1d(pooled, w)) computed with k sublane-sliced FMA taps.

    pooled : (C, 1) f32 value
    w_ref  : (k,)  f32 SMEM ref (conv weights)
    dbl_ref: (2C, 1) f32 VMEM scratch
    Returns (C, 1) f32 with y[c] = sigmoid(sum_j w[j] * pooled[(c + j - pad) mod C]).
    """
    C = pooled.shape[0]
    # Store the pooled vector twice so every circular window is a contiguous,
    # statically-offset sublane slice of the scratch (no roll / gather / matmul).
    dbl_ref[pl.ds(0, C), :] = pooled
    dbl_ref[pl.ds(C, C), :] = pooled
    y = jnp.zeros_like(pooled)
    for j in range(k):                       # k is tiny (3..9) and static -> unrolled
        start = (j - pad) % C                # static Python int
        y = y + w_ref[j] * dbl_ref[pl.ds(start, C), :]
    return jax.nn.sigmoid(y)


# --------------------------- single-pass kernel -----------------------------------

def _ceca_one_pass_kernel(w_ref, x_ref, o_ref, dbl_ref, *, k, pad):
    # w_ref: (k,) f32 SMEM; x_ref/o_ref: (1, C, HW) VMEM blocks; dbl_ref: (2C, 1) f32.
    x = x_ref[0].astype(jnp.float32)                       # (C, HW), f32 math
    pooled = jnp.mean(x, axis=-1, keepdims=True)           # (C, 1) global avg pool
    gate = _circular_conv_sigmoid(pooled, w_ref, dbl_ref, k=k, pad=pad)   # (C, 1)
    o_ref[0] = (x * gate).astype(o_ref.dtype)              # broadcast over lanes (HW)


# --------------------------- two-pass fallback kernels -----------------------------

def _pool_gate_kernel(w_ref, x_ref, gate_ref, dbl_ref, *, k, pad, hw_total, hw_tile,
                      need_mask):
    # grid = (B, n_hw); gate_ref block (1, C, 1) stays resident across the hw axis.
    t = pl.program_id(1)

    @pl.when(t == 0)
    def _init():
        gate_ref[...] = jnp.zeros_like(gate_ref)

    x = x_ref[0].astype(jnp.float32)                       # (C, hw_tile)
    if need_mask:                                          # ragged last HW tile
        lane = jax.lax.broadcasted_iota(jnp.int32, x.shape, 1)
        x = jnp.where(t * hw_tile + lane < hw_total, x, 0.0)
    gate_ref[0] = gate_ref[0] + jnp.sum(x, axis=-1, keepdims=True)

    @pl.when(t == pl.num_programs(1) - 1)
    def _finalize():
        pooled = gate_ref[0] * (1.0 / float(hw_total))     # sum -> mean
        gate_ref[0] = _circular_conv_sigmoid(pooled, w_ref, dbl_ref, k=k, pad=pad)


def _scale_kernel(x_ref, gate_ref, o_ref):
    # x_ref/o_ref: (1, C, hw_tile); gate_ref: (1, C, 1) f32.
    o_ref[0] = (x_ref[0].astype(jnp.float32) * gate_ref[0]).astype(o_ref.dtype)


# --------------------------------- wrapper -----------------------------------------

def ceca_module_forward(x, conv_w, *, force_two_pass=False,
                        vmem_block_budget_bytes=24 * 1024 * 1024):
    """ceca forward.  x: (B, C, H, W); conv_w: (k,) squeezed Conv1d(1,1,k) weight."""
    B, C, H, W = x.shape
    k = int(conv_w.shape[0])
    pad = (k - 1) // 2
    HW = H * W
    itemsize = x.dtype.itemsize

    x3 = x.reshape(B, C, HW)                 # spatial on lanes, channels on sublanes
    w = conv_w.astype(jnp.float32)
    smem_w_spec = pl.BlockSpec(memory_space=pltpu.MemorySpace.SMEM)

    block_bytes = C * HW * itemsize          # one per-batch (1, C, HW) block
    # The in and out blocks are each double-buffered -> ~4x block resident in VMEM.
    # The default 24 MiB budget keeps the kernel <= ~32 MiB scoped VMEM, which is
    # safe on v5e/v6e (128 MiB physical) and on v7x (64 MiB physical).
    one_pass = (not force_two_pass) and (4 * block_bytes <= vmem_block_budget_bytes)

    if one_pass:
        vmem_limit = int(min(120 * 2**20, 4 * block_bytes + 8 * 2**20))
        out = pl.pallas_call(
            functools.partial(_ceca_one_pass_kernel, k=k, pad=pad),
            out_shape=jax.ShapeDtypeStruct((B, C, HW), x.dtype),
            grid_spec=pltpu.PrefetchScalarGridSpec(
                num_scalar_prefetch=0,
                grid=(B,),
                in_specs=[
                    smem_w_spec,                                     # conv weights (SMEM)
                    pl.BlockSpec((1, C, HW), lambda b: (b, 0, 0)),   # x
                ],
                out_specs=pl.BlockSpec((1, C, HW), lambda b: (b, 0, 0)),
                scratch_shapes=[pltpu.VMEM((2 * C, 1), jnp.float32)],
            ),
            compiler_params=pltpu.CompilerParams(
                dimension_semantics=("parallel",),    # batch shards across TCs on v7x
                vmem_limit_bytes=vmem_limit),
        )(w, x3)
        return out.reshape(B, C, H, W)

    # ---- two-pass fallback: pool + gate over HW tiles, then scale over HW tiles ----
    # Lane-dense HW tiles (multiples of 128) sized to the VMEM budget.
    lanes_fit = max(128, (vmem_block_budget_bytes // (4 * C * itemsize)) // 128 * 128)
    if HW <= 128:
        hw_tile = HW                                   # block must equal the full dim
    elif HW % 128 == 0:
        hw_tile = min(HW, lanes_fit)
    else:
        hw_tile = min((HW // 128) * 128, lanes_fit)
    n_hw = pl.cdiv(HW, hw_tile)
    need_mask = (HW % hw_tile) != 0
    tile_bytes = C * hw_tile * itemsize
    vmem_limit = int(min(120 * 2**20, 4 * tile_bytes + 8 * 2**20))

    # Pass 1: accumulate the spatial sum per (b, c) across HW tiles, then turn it into
    # the sigmoid(conv(mean)) gate on the last tile.  Gate stays in f32.
    gate = pl.pallas_call(
        functools.partial(_pool_gate_kernel, k=k, pad=pad, hw_total=HW,
                          hw_tile=hw_tile, need_mask=need_mask),
        out_shape=jax.ShapeDtypeStruct((B, C, 1), jnp.float32),
        grid_spec=pltpu.PrefetchScalarGridSpec(
            num_scalar_prefetch=0,
            grid=(B, n_hw),
            in_specs=[
                smem_w_spec,
                pl.BlockSpec((1, C, hw_tile), lambda b, t: (b, 0, t)),
            ],
            out_specs=pl.BlockSpec((1, C, 1), lambda b, t: (b, 0, 0)),
            scratch_shapes=[pltpu.VMEM((2 * C, 1), jnp.float32)],
        ),
        compiler_params=pltpu.CompilerParams(
            dimension_semantics=("parallel", "arbitrary"),
            vmem_limit_bytes=vmem_limit),
    )(w, x3)

    # Pass 2: x * gate, tiled over HW (both grid axes independent).
    out = pl.pallas_call(
        _scale_kernel,
        out_shape=jax.ShapeDtypeStruct((B, C, HW), x.dtype),
        grid_spec=pltpu.PrefetchScalarGridSpec(
            num_scalar_prefetch=0,
            grid=(B, n_hw),
            in_specs=[
                pl.BlockSpec((1, C, hw_tile), lambda b, t: (b, 0, t)),
                pl.BlockSpec((1, C, 1), lambda b, t: (b, 0, 0)),
            ],
            out_specs=pl.BlockSpec((1, C, hw_tile), lambda b, t: (b, 0, t)),
        ),
        compiler_params=pltpu.CompilerParams(
            dimension_semantics=("parallel", "parallel"),
            vmem_limit_bytes=vmem_limit),
    )(x3, gate)
    return out.reshape(B, C, H, W)


# --------------------------------- reference ---------------------------------------

def _reference(x, conv_w):
    """Pure-JAX reference replicating the PyTorch CecaModule forward."""
    B, C, H, W = x.shape
    k = conv_w.shape[0]
    pad = (k - 1) // 2
    xf = x.astype(jnp.float32)
    wf = conv_w.astype(jnp.float32)
    pooled = xf.mean(axis=(2, 3))                                       # (B, C)
    padded = jnp.concatenate([pooled[:, C - pad:], pooled, pooled[:, :pad]], axis=1)
    y = jnp.stack(
        [jnp.sum(padded[:, c:c + k] * wf[None, :], axis=1) for c in range(C)],
        axis=1)                                                         # (B, C)
    gate = jax.nn.sigmoid(y)
    return (xf * gate[:, :, None, None]).astype(x.dtype)


if __name__ == "__main__":
    def make_case(seed, B, C, H, W):
        kx, kw = jax.random.split(jax.random.PRNGKey(seed))
        x = jax.random.normal(kx, (B, C, H, W), dtype=jnp.float32)
        k = _eca_kernel_size(C)
        bound = 1.0 / math.sqrt(k)
        conv_w = jax.random.uniform(kw, (k,), minval=-bound, maxval=bound,
                                    dtype=jnp.float32)
        return x, conv_w

    # 1) primary small shape -> single-pass path.
    x1, w1 = make_case(0, 2, 4, 16, 16)
    out1 = jax.block_until_ready(ceca_module_forward(x1, w1))
    assert out1.shape == x1.shape
    assert jnp.allclose(out1, _reference(x1, w1), atol=1e-5, rtol=1e-5), \
        "one-pass mismatch"

    # 2) forced two-pass fallback, HW > 128 and not a multiple of 128 (exercises the
    #    ragged-tile masking).
    x2, w2 = make_case(1, 2, 8, 13, 13)
    out2 = jax.block_until_ready(ceca_module_forward(x2, w2, force_two_pass=True))
    assert jnp.allclose(out2, _reference(x2, w2), atol=1e-5, rtol=1e-5), \
        "two-pass mismatch"

    # 3) forced two-pass fallback, HW < 128 (single HW tile, no masking).
    x3_, w3_ = make_case(2, 1, 16, 8, 8)
    out3 = jax.block_until_ready(ceca_module_forward(x3_, w3_, force_two_pass=True))
    assert jnp.allclose(out3, _reference(x3_, w3_), atol=1e-5, rtol=1e-5), \
        "two-pass (small HW) mismatch"

    print("KERNEL_OK")
</pallas_src>

<mosaic_0001>
module attributes {stable_mosaic.version = 11 : i64} {
  func.func @_ceca_one_pass_kernel(%arg0: i32, %arg1: memref<3xf32, #tpu.memory_space<smem>>, %arg2: memref<1x4x256xf32, #tpu.memory_space<vmem>>, %arg3: memref<1x4x256xf32, #tpu.memory_space<vmem>>, %arg4: memref<8x1xf32, #tpu.memory_space<vmem>>) attributes {dimension_semantics = [#tpu.dimension_semantics<parallel>], iteration_bounds = array<i64: 2>, scalar_prefetch = 0 : i64, scratch_operands = 1 : i64, tpu.core_type = #tpu.core_type<tc>, window_params = [{transform_indices = @transform_0, window_bounds = array<i64: 3>}, {transform_indices = @transform_1, window_bounds = array<i64: 1, 4, 256>}, {transform_indices = @transform_2, window_bounds = array<i64: 1, 4, 256>}]} {
    %c0 = arith.constant 0 : index
    %c0_0 = arith.constant 0 : index
    %c0_1 = arith.constant 0 : index
    %0 = vector.load %arg2[%c0, %c0_0, %c0_1] : memref<1x4x256xf32, #tpu.memory_space<vmem>>, vector<1x4x256xf32>
    %1 = vector.shape_cast %0 : vector<1x4x256xf32> to vector<4x256xf32>
    %cst = arith.constant dense<0.000000e+00> : vector<4xf32>
    %2 = vector.multi_reduction <add>, %1, %cst [1] : vector<4x256xf32> to vector<4xf32>
    %3 = vector.shape_cast %2 : vector<4xf32> to vector<4x1xf32>
    %cst_2 = arith.constant 2.560000e+02 : f32
    %4 = vector.broadcast %cst_2 : f32 to vector<4x1xf32>
    %5 = arith.divf %3, %4 : vector<4x1xf32>
    %c0_3 = arith.constant 0 : index
    %c0_4 = arith.constant 0 : index
    %6 = vector.load %arg4[%c0_3, %c0_4] : memref<8x1xf32, #tpu.memory_space<vmem>>, vector<4x1xf32>
    tpu.vector_store %arg4[%c0_3, %c0_4], %5 {strides = array<i32>} : memref<8x1xf32, #tpu.memory_space<vmem>>, vector<4x1xf32>,
    %c4 = arith.constant 4 : index
    %c0_5 = arith.constant 0 : index
    %7 = vector.load %arg4[%c4, %c0_5] : memref<8x1xf32, #tpu.memory_space<vmem>>, vector<4x1xf32>
    tpu.vector_store %arg4[%c4, %c0_5], %5 {strides = array<i32>} : memref<8x1xf32, #tpu.memory_space<vmem>>, vector<4x1xf32>,
    %cst_6 = arith.constant 0.000000e+00 : f32
    %8 = vector.broadcast %cst_6 : f32 to vector<4x1xf32>
    %c0_7 = arith.constant 0 : index
    %9 = memref.load %arg1[%c0_7] : memref<3xf32, #tpu.memory_space<smem>>
    %c3 = arith.constant 3 : index
    %c0_8 = arith.constant 0 : index
    %10 = vector.load %arg4[%c3, %c0_8] : memref<8x1xf32, #tpu.memory_space<vmem>>, vector<4x1xf32>
    %11 = vector.broadcast %9 : f32 to vector<4x1xf32>
    %12 = arith.mulf %11, %10 : vector<4x1xf32>
    %13 = arith.addf %8, %12 : vector<4x1xf32>
    %c1 = arith.constant 1 : index
    %14 = memref.load %arg1[%c1] : memref<3xf32, #tpu.memory_space<smem>>
    %c0_9 = arith.constant 0 : index
    %c0_10 = arith.constant 0 : index
    %15 = vector.load %arg4[%c0_9, %c0_10] : memref<8x1xf32, #tpu.memory_space<vmem>>, vector<4x1xf32>
    %16 = vector.broadcast %14 : f32 to vector<4x1xf32>
    %17 = arith.mulf %16, %15 : vector<4x1xf32>
    %18 = arith.addf %13, %17 : vector<4x1xf32>
    %c2 = arith.constant 2 : index
    %19 = memref.load %arg1[%c2] : memref<3xf32, #tpu.memory_space<smem>>
    %c1_11 = arith.constant 1 : index
    %c0_12 = arith.constant 0 : index
    %20 = vector.load %arg4[%c1_11, %c0_12] : memref<8x1xf32, #tpu.memory_space<vmem>>, vector<4x1xf32>
    %21 = vector.broadcast %19 : f32 to vector<4x1xf32>
    %22 = arith.mulf %21, %20 : vector<4x1xf32>
    %23 = arith.addf %18, %22 : vector<4x1xf32>
    %24 = arith.negf %23 : vector<4x1xf32>
    %25 = math.exp %24 : vector<4x1xf32>
    %cst_13 = arith.constant 1.000000e+00 : f32
    %26 = vector.broadcast %cst_13 : f32 to vector<4x1xf32>
    %27 = arith.addf %26, %25 : vector<4x1xf32>
    %28 = arith.divf %26, %27 : vector<4x1xf32>
    %29 = vector.broadcast %28 : vector<4x1xf32> to vector<4x256xf32>
    %30 = arith.mulf %1, %29 : vector<4x256xf32>
    %c0_14 = arith.constant 0 : index
    %c0_15 = arith.constant 0 : index
    %c0_16 = arith.constant 0 : index
    %31 = vector.load %arg3[%c0_14, %c0_15, %c0_16] : memref<1x4x256xf32, #tpu.memory_space<vmem>>, vector<1x4x256xf32>
    %32 = vector.shape_cast %31 : vector<1x4x256xf32> to vector<4x256xf32>
    %33 = vector.shape_cast %30 : vector<4x256xf32> to vector<1x4x256xf32>
    tpu.vector_store %arg3[%c0_14, %c0_15, %c0_16], %33 {strides = array<i32>} : memref<1x4x256xf32, #tpu.memory_space<vmem>>, vector<1x4x256xf32>,
    return
  }
  func.func @transform_0(%arg0: i32) -> i32 {
    %c0_i32 = arith.constant 0 : i32
    %c0_i32_0 = arith.constant 0 : i32
    return %c0_i32 : i32
  }
  func.func @transform_1(%arg0: i32) -> (i32, i32, i32) {
    %c0_i32 = arith.constant 0 : i32
    %c0_i32_0 = arith.constant 0 : i32
    %c0_i32_1 = arith.constant 0 : i32
    return %arg0, %c0_i32, %c0_i32_0 : i32, i32, i32
  }
  func.func @transform_2(%arg0: i32) -> (i32, i32, i32) {
    %c0_i32 = arith.constant 0 : i32
    %c0_i32_0 = arith.constant 0 : i32
    %c0_i32_1 = arith.constant 0 : i32
    return %arg0, %c0_i32, %c0_i32_0 : i32, i32, i32
  }
}

</mosaic_0001>

<llo_original>
// kernel: tpu_custom_call.1
$region0: #{tpu_custom_call.1}
  #allocation0 [shape = 'u32[]', space=smem, size = 0x4, offset = 0x4, fixed_abs, tag = 'smem constant byte address 0x4 - core index']
  #allocation1 [shape = 'u32[144,128]{1,0:T(1,128)}', space=vmem, size = 0x12000, scoped, tag = 'internal scratch']
  #allocation2 [shape = 'f32[8,1]{1,0:T(8,128)}', space=vmem, size = 0x1000, scoped, tag = 'scratch operand']
  %s0 = inlined_call_operand.hbm [shape: f32[3], index: 0, kind: input, shape index: {}]
  %s1 = inlined_call_operand.hbm [shape: f32[2,4,256], index: 1, kind: input, shape index: {}]
  %s2 = inlined_call_operand.hbm [shape: f32[2,4,256], index: 2, kind: output, shape index: {}]
  %s3 = sld [smem:[#allocation0]]
  $region49: #{tpu_custom_call.1} parent=0
    _
  %s5 = ssub.s32 1, %s3
  %s6 = scalar_select 0, %s5, %s3
  $region1: #{tpu_custom_call.1} parent=0
    #allocation3 [shape = 'u8[512]{0}', space=smem, size = 0x200, scoped, tag = 'input window, operand 0, single buffered']
    #allocation4 [shape = 's32[2]{0}', space=sflag, size = 0x8, scoped, tag = 'scoped memory for tpu_custom_call.1']
    #allocation5 [shape = 's32[2]{0}', space=sflag, size = 0x8, scoped, tag = 'scoped memory for tpu_custom_call.1']
    #allocation6 [shape = 's32[2]{0}', space=sflag, size = 0x8, scoped, tag = 'scoped memory for tpu_custom_call.1']
    #allocation7 [shape = 'u8[8192]{0}', space=vmem, size = 0x2000, scoped, tag = 'input window, operand 1']
    #allocation8 [shape = 'u8[8192]{0}', space=vmem, size = 0x2000, scoped, tag = 'output window, operand 0']
    %7 = vsyncpa [#allocation6], 0
    %8 = vsyncpa [#allocation4], 0
    %s9 = scalar_lea.sflag [#allocation4], 1
    %10 = vsyncpa %s9, 0
    %11 = vsyncpa [#allocation5], 0
    %s12 = scalar_lea.sflag [#allocation5], 1
    %13 = vsyncpa %s12, 0
    loop: start=0, step=1, limit=4
    $region2: #{tpu_custom_call.1} parent=1 // loop_pre_header
      _
    $region3: #{tpu_custom_call.1} parent=1 // loop_header
      %s15 = sphi 0, %s19
      %p16 = scmp.ge.s32.totalorder %s15, 4
      %s23 = sphi 0, %s23
      %s25 = sphi 0, %s23
      %s26 = sphi 0, %s25
      %s40 = sphi 0, %s26
      %s46 = sphi 0, %s48
      %s49 = sphi 0, %s46
      %s50 = sphi 0, %s49
      %s66 = sphi 0, %s50
      %s72 = sphi 0, %s74
      %s75 = sphi 0, %s72
      %s76 = sphi 0, %s75
      %s92 = sphi 0, %s76
    $region4: #{tpu_custom_call.1} parent=1 // loop_header_branch
      %18 = sbr.rel (%p16) target = $region8
    $region5: #{tpu_custom_call.1} parent=1 // loop_body
      %s20 = ssub.s32 %s15, 1
      %s21 = ssub.s32 %s15, 2
      %s22 = sadd.s32 %s15, 1
      %s24 = sadd.s32 %s23, 1
      %p27 = scmp.eq.s32.totalorder %s15, 1
      %p28 = scmp.ne.s32.totalorder %s23, %s25
      %p29 = scmp.eq.s32.totalorder %s15, 0
      %p30 = por %p28, %p29
      %p31 = scmp.ne.s32.totalorder %s23, %s25
      %p32 = scmp.eq.s32.totalorder %s20, 1
      %p33 = por %p31, %p32
      %p34 = scmp.ne.s32.totalorder %s25, %s26
      %p35 = scmp.eq.s32.totalorder %s20, 0
      %p36 = por %p34, %p35
      %p37 = scmp.ne.s32.totalorder %s25, %s26
      %p38 = scmp.eq.s32.totalorder %s21, 1
      %p39 = por %p37, %p38
      %p41 = scmp.ne.s32.totalorder %s26, %s40
      %p42 = scmp.eq.s32.totalorder %s21, 0
      %p43 = por %p41, %p42
      %s44 = ssub.s32 %s15, %s22
      %p45 = scmp.eq.s32.totalorder %s44, 0
      %s47 = sadd.s32 %s46, 1
      %s48 = scalar_select %p45, %s46, %s47
      %p51 = pneg %p45
      %p52 = scmp.eq.s32.totalorder %s15, 1
      %p53 = por %p51, %p52
      %p54 = scmp.ne.s32.totalorder %s46, %s49
      %p55 = scmp.eq.s32.totalorder %s15, 0
      %p56 = por %p54, %p55
      %p57 = scmp.ne.s32.totalorder %s46, %s49
      %p58 = scmp.eq.s32.totalorder %s20, 1
      %p59 = por %p57, %p58
      %p60 = scmp.ne.s32.totalorder %s49, %s50
      %p61 = scmp.eq.s32.totalorder %s20, 0
      %p62 = por %p60, %p61
      %p63 = scmp.ne.s32.totalorder %s49, %s50
      %p64 = scmp.eq.s32.totalorder %s21, 1
      %p65 = por %p63, %p64
      %p67 = scmp.ne.s32.totalorder %s50, %s66
      %p68 = scmp.eq.s32.totalorder %s21, 0
      %p69 = por %p67, %p68
      %s70 = ssub.s32 %s15, %s22
      %p71 = scmp.eq.s32.totalorder %s70, 0
      %s73 = sadd.s32 %s72, 1
      %s74 = scalar_select %p71, %s72, %s73
      %p77 = pneg %p71
      %p78 = scmp.eq.s32.totalorder %s15, 1
      %p79 = por %p77, %p78
      %p80 = scmp.ne.s32.totalorder %s72, %s75
      %p81 = scmp.eq.s32.totalorder %s15, 0
      %p82 = por %p80, %p81
      %p83 = scmp.ne.s32.totalorder %s72, %s75
      %p84 = scmp.eq.s32.totalorder %s20, 1
      %p85 = por %p83, %p84
      %p86 = scmp.ne.s32.totalorder %s75, %s76
      %p87 = scmp.eq.s32.totalorder %s20, 0
      %p88 = por %p86, %p87
      %p89 = scmp.ne.s32.totalorder %s75, %s76
      %p90 = scmp.eq.s32.totalorder %s21, 1
      %p91 = por %p89, %p90
      %p93 = scmp.ne.s32.totalorder %s76, %s92
      %p94 = scmp.eq.s32.totalorder %s21, 0
      %p95 = por %p93, %p94
      %p96 = scmp.le.s32.totalorder 1, %s15
      %p97 = scmp.lt.s32.totalorder %s15, 3
      %p98 = pnand %p96, %p97
      %p99 = pneg %p98
      // Predicated region
      $region9: #{tpu_custom_call.1} parent=5 // pred_check
        _
      $region10: #{tpu_custom_call.1} parent=5 // pred_check_branch
        %101 = sbr.rel (%p98) target = $region12
      $region11: #{tpu_custom_call.1} parent=5 // pred_region
        %s102 = ssub.s32 %s15, 1
        // Predicated region
        $region13: #{tpu_custom_call.1} parent=11 // pred_check
          %p103 = pneg %p36
        $region14: #{tpu_custom_call.1} parent=11 // pred_check_branch
          %105 = sbr.rel (%p103) target = $region16
        $region15: #{tpu_custom_call.1} parent=11 // pred_region
          %s107 = ssub.s32 16, 16
          %108 = vsyncadd [#allocation6], %s107
          %111 = dma.hbm_to_smem %s0, 16, [#allocation3], [#allocation6]
        $region16: #{tpu_custom_call.1} parent=11 // pred_fallthru
          _
      $region12: #{tpu_custom_call.1} parent=5 // pred_fallthru
        _
      %p112 = scmp.lt.s32.totalorder %s15, 2
      // Predicated region
      $region17: #{tpu_custom_call.1} parent=5 // pred_check
        %p113 = pneg %p112
      $region18: #{tpu_custom_call.1} parent=5 // pred_check_branch
        %115 = sbr.rel (%p113) target = $region20
      $region19: #{tpu_custom_call.1} parent=5 // pred_region
        // Predicated region
        $region21: #{tpu_custom_call.1} parent=19 // pred_check
          %p116 = pneg %p56
        $region22: #{tpu_custom_call.1} parent=19 // pred_check_branch
          %118 = sbr.rel (%p116) target = $region24
        $region23: #{tpu_custom_call.1} parent=19 // pred_region
          %s119 = sand.u32 %s46, 1
          %s120 = scalar_lea.sflag [#allocation4], %s119
          %s121 = sand.u32 %s46, 1
          %s122 = smul.addr %s121, 8
          %s123 = scalar_lea.vmem [#allocation7], %s122
          %s125 = ssub.s32 128, 128
          %126 = vsyncadd %s120, %s125
          %s127 = smul.addr %s15, 2
          %s128 = smul.addr %s127, 64
          %s129 = scalar_lea.hbm %s1, %s128
          %s131 = sshll.u32 %s123, 4
          %s132 = int_to_ptr.vmem [resolvable:$true] %s131
          %134 = dma.hbm_to_vmem [thread:$0]  %s129, 128, %s132, %s120
        $region24: #{tpu_custom_call.1} parent=19 // pred_fallthru
          _
      $region20: #{tpu_custom_call.1} parent=5 // pred_fallthru
        _
      %p135 = scmp.le.s32.totalorder 1, %s15
      %p136 = scmp.lt.s32.totalorder %s15, 3
      %p137 = pnand %p135, %p136
      %p138 = pneg %p137
      // Predicated region
      $region25: #{tpu_custom_call.1} parent=5 // pred_check
        _
      $region26: #{tpu_custom_call.1} parent=5 // pred_check_branch
        %140 = sbr.rel (%p137) target = $region28
      $region27: #{tpu_custom_call.1} parent=5 // pred_region
        %s141 = ssub.s32 %s15, 1
        // Predicated region
        $region29: #{tpu_custom_call.1} parent=27 // pred_check
          %p142 = pneg %p36
        $region30: #{tpu_custom_call.1} parent=27 // pred_check_branch
          %144 = sbr.rel (%p142) target = $region32
        $region31: #{tpu_custom_call.1} parent=27 // pred_region
          %145 = dma.done [#allocation6], 16
        $region32: #{tpu_custom_call.1} parent=27 // pred_fallthru
          _
        %s146 = sand.u32 %s49, 1
        %s147 = scalar_lea.sflag [#allocation4], %s146
        %s148 = sand.u32 %s49, 1
        %s149 = smul.addr %s148, 8
        %s150 = scalar_lea.vmem [#allocation7], %s149
        // Predicated region
        $region33: #{tpu_custom_call.1} parent=27 // pred_check
          %p151 = pneg %p62
        $region34: #{tpu_custom_call.1} parent=27 // pred_check_branch
          %153 = sbr.rel (%p151) target = $region36
        $region35: #{tpu_custom_call.1} parent=27 // pred_region
          %154 = dma.done %s147, 128
        $region36: #{tpu_custom_call.1} parent=27 // pred_fallthru
          _
        %155 = sfence
        %p156 = pneg %p36
        %p157 = pneg %p33
        %s158 = sand.u32 %s49, 1
        %s159 = scalar_lea.sflag [#allocation4], %s158
        %s160 = sand.u32 %s49, 1
        %s161 = smul.addr %s160, 8
        %s162 = scalar_lea.vmem [#allocation7], %s161
        %p163 = pneg %p62
        %p164 = pneg %p59
        %p165 = pneg %p88
        %p166 = pneg %p85
        %s167 = sand.u32 %s75, 1
        %s168 = scalar_lea.sflag [#allocation5], %s167
        %s169 = sand.u32 %s75, 1
        %s170 = smul.addr %s169, 8
        %s171 = scalar_lea.vmem [#allocation8], %s170
        %v172 = vld [vmem:[%s150] sm:$0xff]
        %v174 = vcombine.high %v172, %v172
        %vm176 = vcmask 1043456
        %v177 = vsel %vm176, %v172, 0.0
        %v178 = vsel %vm176, %v174, 0.0
        %v179 = vadd.f32 %v177, %v178
        %180 = vadd.xlane.f32.xlu0 %v179
        %v181 = vpop.xlane.xlu0 %180
        %v182 = vrcp.pop 256.0
        %v183 = vmul.f32 %v181, %v182
        %vm184 = vcmask 3072
        %185 = vst.msk [vmem:[#allocation2] sm:$0xf] %vm184, %v183
        %186 = vst.msk [vmem:[#allocation2 + $0x4] sm:$0xf] %vm184, %v183
        %s187 = sld [smem:[#allocation3]]
        %v188 = vld [vmem:[#allocation2 + $0x3] sm:$0xf]
        %v189 = vstv %s187
        %v190 = vmul.f32 %v189, %v188
        %v191 = vadd.f32 %v190, 0.0
        %s192 = sld [smem:[#allocation3 + $0x1]]
        %v193 = vld [vmem:[#allocation2] sm:$0xf]
        %v194 = vstv %s192
        %v195 = vmul.f32 %v194, %v193
        %v196 = vadd.f32 %v191, %v195
        %s197 = sld [smem:[#allocation3 + $0x2]]
        %v198 = vld [vmem:[#allocation2 + $0x1] sm:$0xf]
        %v199 = vstv %s197
        %v200 = vmul.f32 %v199, %v198
        %v201 = vadd.f32 %v196, %v200
        %v202 = vxor.u32 %v201, 2147483648
        %v203 = vmul.f32 %v202, 1.442695
        %v204 = vpow.pop %v203
        %v205 = vadd.f32 %v204, 1.0
        %v206 = vrcp.pop %v205
        %v207 = vmul.f32 1.0, %v206
        %209 = vset.pattern.permute.xlu0 0
        %210 = vperm.xlu0 %209, %v207
        %v211 = vpop.permute.xlu0 %210
        %v213 = vunpack.c.l.s4 839922192
        %v214 = vunpack.c.0.s8 %v213
        %v215 = vlaneseq
        %v216 = vshrl.u32 %v215, 7
        %v217 = vsub.s32 %v214, %v216
        %v218 = vrot.slane %v211, %v217
        %v220 = vmul.f32 %v172, %v218
        %221 = vst [vmem:[%s171] sm:$0xff] %v220
        %s222 = sand.u32 %s75, 1
        %s223 = scalar_lea.sflag [#allocation5], %s222
        %s224 = sand.u32 %s75, 1
        %s225 = smul.addr %s224, 8
        %s226 = scalar_lea.vmem [#allocation8], %s225
        // Predicated region
        $region37: #{tpu_custom_call.1} parent=27 // pred_check
          %p227 = pneg %p85
        $region38: #{tpu_custom_call.1} parent=27 // pred_check_branch
          %229 = sbr.rel (%p227) target = $region40
        $region39: #{tpu_custom_call.1} parent=27 // pred_region
          %s231 = ssub.s32 128, 128
          %232 = vsyncadd %s223, %s231
          %s233 = smul.addr %s20, 2
          %s234 = smul.addr %s233, 64
          %s235 = scalar_lea.hbm %s2, %s234
          %s237 = sshll.u32 %s226, 4
          %s238 = int_to_ptr.vmem [resolvable:$true] %s237
          %240 = dma.vmem_to_hbm [thread:$0]  %s238, 128, %s235, %s223
        $region40: #{tpu_custom_call.1} parent=27 // pred_fallthru
          _
      $region28: #{tpu_custom_call.1} parent=5 // pred_fallthru
        _
      %p241 = scmp.le.s32.totalorder 2, %s15
      // Predicated region
      $region41: #{tpu_custom_call.1} parent=5 // pred_check
        %p242 = pneg %p241
      $region42: #{tpu_custom_call.1} parent=5 // pred_check_branch
        %244 = sbr.rel (%p242) target = $region44
      $region43: #{tpu_custom_call.1} parent=5 // pred_region
        %s245 = ssub.s32 %s15, 2
        // Predicated region
        $region45: #{tpu_custom_call.1} parent=43 // pred_check
          %p246 = pneg %p91
        $region46: #{tpu_custom_call.1} parent=43 // pred_check_branch
          %248 = sbr.rel (%p246) target = $region48
        $region47: #{tpu_custom_call.1} parent=43 // pred_region
          %s249 = sand.u32 %s76, 1
          %s250 = scalar_lea.sflag [#allocation5], %s249
          %s251 = sand.u32 %s76, 1
          %s252 = smul.addr %s251, 8
          %s253 = scalar_lea.vmem [#allocation8], %s252
          %254 = dma.done %s250, 128
        $region48: #{tpu_custom_call.1} parent=43 // pred_fallthru
          _
      $region44: #{tpu_custom_call.1} parent=5 // pred_fallthru
        _
    $region6: #{tpu_custom_call.1} parent=1 // loop_footer
      %s19 = sadd.s32 1, %s15
    $region7: #{tpu_custom_call.1} parent=1 // loop_footer_branch
      %14 = sbr.rel target = $region3
    $region8: #{tpu_custom_call.1} parent=1 // loop_exit
      _
    %255 = vsyncpa [#allocation4], 1
    %s256 = scalar_lea.sflag [#allocation4], 1
    %257 = vsyncpa %s256, 1
    %258 = vsyncpa [#allocation5], 1
    %s259 = scalar_lea.sflag [#allocation5], 1
    %260 = vsyncpa %s259, 1
    %261 = vsyncpa [#allocation6], 1
    %s262 = scalar_lea.sflag [#allocation6], 1
    %263 = vsyncpa %s262, 1

</llo_original>
